<compile_context>
chip_gen: v6e
topology: v6e:2x2x1
jax: 0.10.0
libtpu: 0.0.40
codegen_flags: <defaults>
</compile_context>

<pallas_src>
import functools
import math

import jax
import jax.numpy as jnp
from jax import lax
from jax.experimental import pallas as pl
from jax.experimental.pallas import tpu as pltpu


def _local_attention_kernel(window_size, return_weights,
                            q_ref, k_ref, v_ref,
                            wq_ref, bq_ref, wk_ref, bk_ref,
                            wv_ref, bv_ref, wo_ref, bo_ref,
                            *out_refs):
    out_ref = out_refs[0]
    attn_ref = out_refs[1] if return_weights else None

    BT, Lq, H = q_ref.shape
    _, Lk, Din = k_ref.shape
    Hh = wq_ref.shape[1]

    # Fold batch into the matmul M dimension.  The reshape is done in f32
    # (layout-free: last dim unchanged, sublane tile is 8); the bf16 cast is a
    # vreg-level op feeding the MXU.
    q2 = q_ref[...].reshape(BT * Lq, H).astype(jnp.bfloat16)
    k2 = k_ref[...].reshape(BT * Lk, Din).astype(jnp.bfloat16)
    v2 = v_ref[...].reshape(BT * Lk, Din).astype(jnp.bfloat16)

    # Projections.  Weights are pre-transposed to [in, out] in the wrapper,
    # bf16 operands, f32 accumulation, f32 bias add.
    pq = jnp.dot(q2, wq_ref[...], preferred_element_type=jnp.float32) + bq_ref[...]
    pk = jnp.dot(k2, wk_ref[...], preferred_element_type=jnp.float32) + bk_ref[...]
    pv = jnp.dot(v2, wv_ref[...], preferred_element_type=jnp.float32) + bv_ref[...]

    pq3 = pq.reshape(BT, Lq, Hh).astype(jnp.bfloat16)
    pk3 = pk.reshape(BT, Lk, Hh).astype(jnp.bfloat16)
    pv3 = pv.reshape(BT, Lk, Hh).astype(jnp.bfloat16)

    # scores = Q @ K^T batched over BT; contraction on the last dims so no
    # transpose is materialized.
    scores = jnp.einsum("bqh,bkh->bqk", pq3, pk3,
                        preferred_element_type=jnp.float32)

    # In-kernel local-window band mask (no HBM bias input).  The PyTorch
    # module allows keys j in [i - window, i + window] and does NOT scale by
    # 1/sqrt(hidden_size); we mirror that exactly.
    qi = lax.broadcasted_iota(jnp.int32, (Lq, Lk), 0)
    ki = lax.broadcasted_iota(jnp.int32, (Lq, Lk), 1)
    allowed = (ki >= qi - window_size) & (ki <= qi + window_size)
    scores = jnp.where(allowed[None, :, :], scores, jnp.float32(-1e30))

    # Softmax over keys, f32 elementwise (v5e has no bf16 VPU/EUP path).
    m = jnp.max(scores, axis=-1, keepdims=True)
    p = jnp.exp(scores - m)
    l = jnp.sum(p, axis=-1, keepdims=True)
    weights = p / l                                  # exact: rows sum to 1

    # context = weights @ V, then output projection.
    ctx = jnp.einsum("bqk,bkh->bqh", weights.astype(jnp.bfloat16), pv3,
                     preferred_element_type=jnp.float32)
    ctx2 = ctx.reshape(BT * Lq, Hh).astype(jnp.bfloat16)
    # TODO(synk): the PyTorch source calls self.output_linear (an undefined
    # attribute); we use the declared self.out_linear weights (obvious intent).
    out = jnp.dot(ctx2, wo_ref[...], preferred_element_type=jnp.float32) + bo_ref[...]

    out_ref[...] = out.reshape(BT, Lq, Hh).astype(out_ref.dtype)
    if return_weights:
        attn_ref[...] = weights.astype(attn_ref.dtype)


def _default_vmem_limit():
    """~3/4 of physical VMEM, capped at 100 MiB (v5e/v6e: ~96-100 MiB, v7x: 48 MiB)."""
    try:
        info = pltpu.get_tpu_info()
        cap = getattr(info, "vmem_capacity_bytes", None)
        if cap:
            return int(min(100 * 1024 * 1024, cap * 3 // 4))
    except Exception:
        pass
    return 48 * 1024 * 1024   # conservative fallback, safe on v7x's 64 MiB


def _choose_batch_tile(B, per_batch_bytes):
    """Pick a batch tile with a few-MiB working set and >=2 (ideally >=4) grid steps."""
    target_bytes = 4 * 1024 * 1024
    bt = max(1, target_bytes // max(per_batch_bytes, 1))
    if B >= 4:
        bt = min(bt, B // 4)     # >= 4 steps: lets double-buffering overlap DMA
    elif B >= 2:
        bt = min(bt, B // 2)     # >= 2 steps: feeds both TensorCores on v7x
    bt = max(1, min(bt, B))
    while B % bt:                # make it divide B
        bt -= 1
    return bt


def local_attention(query, key, value, params, window_size, *,
                    batch_tile=None, return_weights=True, vmem_limit_bytes=None):
    """query: (B, Lq, hidden), key/value: (B, Lk, input). Returns (output, attn_weights)."""
    B, Lq, H = query.shape
    _, Lk, Din = key.shape
    wq, bq, wk, bk, wv, bv, wo, bo = params
    Hh = wq.shape[0]

    # One-time layout plumbing in the wrapper:
    #   * pre-transpose weights to [in, out] (bf16) so the kernel never transposes
    #   * biases as lane-dense (1, Hh) f32 rows
    #   * q/k/v stay f32 in HBM; bf16 cast happens in-kernel for MXU operands
    bf16 = lambda x: x.astype(jnp.bfloat16)
    wq_t, wk_t, wv_t, wo_t = (bf16(w.T) for w in (wq, wk, wv, wo))
    bq2, bk2, bv2, bo2 = (
        b.reshape(1, -1).astype(jnp.float32) for b in (bq, bk, bv, bo)
    )

    if batch_tile is None:
        # rough f32 per-batch-element working set (inputs + projections + scores)
        per_b = 4 * (Lq * H + 2 * Lk * Din + 3 * Lq * Hh + 2 * Lq * Lk)
        batch_tile = _choose_batch_tile(B, per_b)
    assert B % batch_tile == 0
    num_tiles = B // batch_tile

    if vmem_limit_bytes is None:
        vmem_limit_bytes = _default_vmem_limit()

    full = lambda shp: pl.BlockSpec(shp, lambda b: (0,) * len(shp))

    out_shapes = [jax.ShapeDtypeStruct((B, Lq, Hh), jnp.float32)]
    out_specs = [pl.BlockSpec((batch_tile, Lq, Hh), lambda b: (b, 0, 0))]
    if return_weights:
        # Kept f32 to match torch.softmax output; pass return_weights=False to
        # drop the O(B*L^2) writeback when the weights are not needed.
        out_shapes.append(jax.ShapeDtypeStruct((B, Lq, Lk), jnp.float32))
        out_specs.append(pl.BlockSpec((batch_tile, Lq, Lk), lambda b: (b, 0, 0)))

    kernel = functools.partial(_local_attention_kernel, window_size, return_weights)

    results = pl.pallas_call(
        kernel,
        out_shape=tuple(out_shapes),
        grid_spec=pltpu.PrefetchScalarGridSpec(
            num_scalar_prefetch=0,
            grid=(num_tiles,),
            in_specs=[
                pl.BlockSpec((batch_tile, Lq, H), lambda b: (b, 0, 0)),    # query
                pl.BlockSpec((batch_tile, Lk, Din), lambda b: (b, 0, 0)),  # key
                pl.BlockSpec((batch_tile, Lk, Din), lambda b: (b, 0, 0)),  # value
                full((H, Hh)),   full((1, Hh)),                            # W_q^T, b_q
                full((Din, Hh)), full((1, Hh)),                            # W_k^T, b_k
                full((Din, Hh)), full((1, Hh)),                            # W_v^T, b_v
                full((Hh, Hh)),  full((1, Hh)),                            # W_o^T, b_o
            ],
            out_specs=out_specs,
        ),
        compiler_params=pltpu.CompilerParams(
            dimension_semantics=("parallel",),
            vmem_limit_bytes=int(vmem_limit_bytes),
        ),
    )(query, key, value, wq_t, bq2, wk_t, bk2, wv_t, bv2, wo_t, bo2)

    if return_weights:
        return results[0], results[1]
    return results[0], None


def init_params(key, input_size, hidden_size):
    """Deterministic PyTorch-Linear-style init: U(-1/sqrt(fan_in), 1/sqrt(fan_in))."""
    def linear_init(k, out_f, in_f):
        k1, k2 = jax.random.split(k)
        bound = 1.0 / math.sqrt(in_f)
        w = jax.random.uniform(k1, (out_f, in_f), jnp.float32, -bound, bound)
        b = jax.random.uniform(k2, (out_f,), jnp.float32, -bound, bound)
        return w, b

    kq, kk, kv, ko = jax.random.split(key, 4)
    wq, bq = linear_init(kq, hidden_size, hidden_size)   # query_linear
    wk, bk = linear_init(kk, hidden_size, input_size)    # key_linear
    wv, bv = linear_init(kv, hidden_size, input_size)    # value_linear
    wo, bo = linear_init(ko, hidden_size, hidden_size)   # out_linear
    return (wq, bq, wk, bk, wv, bv, wo, bo)


def local_attention_ref(query, key, value, params, window_size):
    """Pure-JAX reference mirroring the PyTorch forward (bf16 MXU operands, f32 accumulate)."""
    wq, bq, wk, bk, wv, bv, wo, bo = params
    b16 = lambda x: x.astype(jnp.bfloat16)

    pq = jnp.dot(b16(query), b16(wq.T), preferred_element_type=jnp.float32) + bq
    pk = jnp.dot(b16(key), b16(wk.T), preferred_element_type=jnp.float32) + bk
    pv = jnp.dot(b16(value), b16(wv.T), preferred_element_type=jnp.float32) + bv

    scores = jnp.einsum("bqh,bkh->bqk", b16(pq), b16(pk),
                        preferred_element_type=jnp.float32)
    Lq, Lk = scores.shape[1], scores.shape[2]
    i = jnp.arange(Lq)[:, None]
    j = jnp.arange(Lk)[None, :]
    allowed = (j >= i - window_size) & (j <= i + window_size)
    scores = jnp.where(allowed[None], scores, -jnp.inf)
    w = jax.nn.softmax(scores, axis=-1)
    ctx = jnp.einsum("bqk,bkh->bqh", b16(w), b16(pv),
                     preferred_element_type=jnp.float32)
    out = jnp.dot(b16(ctx), b16(wo.T), preferred_element_type=jnp.float32) + bo
    return out, w


if __name__ == "__main__":
    input_size = 32
    hidden_size = 32
    window_size = 2
    B, Lq, Lk = 2, 8, 8

    root = jax.random.PRNGKey(0)
    kp, kq, kk, kv = jax.random.split(root, 4)
    params = init_params(kp, input_size, hidden_size)

    query = jax.random.normal(kq, (B, Lq, hidden_size), jnp.float32)
    key = jax.random.normal(kk, (B, Lk, input_size), jnp.float32)
    value = jax.random.normal(kv, (B, Lk, input_size), jnp.float32)

    out, attn = local_attention(query, key, value, params, window_size)
    out = jax.block_until_ready(out)
    attn = jax.block_until_ready(attn)

    out_ref, attn_ref = local_attention_ref(query, key, value, params, window_size)
    assert out.shape == (B, Lq, hidden_size) and attn.shape == (B, Lq, Lk)
    assert not bool(jnp.any(jnp.isnan(out))) and not bool(jnp.any(jnp.isnan(attn)))
    # Matmul numerics (bf16 operands, f32 accumulate) are mirrored in the
    # reference; softmax normalization in the kernel is exact.
    assert jnp.allclose(out, out_ref, atol=2e-2, rtol=2e-2), "output mismatch"
    assert jnp.allclose(attn, attn_ref, atol=2e-2, rtol=2e-2), "attention mismatch"
    # Returned attention rows are exactly normalized (exact divide in kernel).
    assert jnp.allclose(jnp.sum(attn, axis=-1), 1.0, atol=1e-5), "rows not normalized"

    print("KERNEL_OK")
</pallas_src>

<mosaic_0001>
module attributes {stable_mosaic.version = 11 : i64} {
  func.func @_local_attention_kernel(%arg0: i32, %arg1: memref<1x8x32xf32, #tpu.memory_space<vmem>>, %arg2: memref<1x8x32xf32, #tpu.memory_space<vmem>>, %arg3: memref<1x8x32xf32, #tpu.memory_space<vmem>>, %arg4: memref<32x32xbf16, #tpu.memory_space<vmem>>, %arg5: memref<1x32xf32, #tpu.memory_space<vmem>>, %arg6: memref<32x32xbf16, #tpu.memory_space<vmem>>, %arg7: memref<1x32xf32, #tpu.memory_space<vmem>>, %arg8: memref<32x32xbf16, #tpu.memory_space<vmem>>, %arg9: memref<1x32xf32, #tpu.memory_space<vmem>>, %arg10: memref<32x32xbf16, #tpu.memory_space<vmem>>, %arg11: memref<1x32xf32, #tpu.memory_space<vmem>>, %arg12: memref<1x8x32xf32, #tpu.memory_space<vmem>>, %arg13: memref<1x8x8xf32, #tpu.memory_space<vmem>>) attributes {dimension_semantics = [#tpu.dimension_semantics<parallel>], iteration_bounds = array<i64: 2>, scalar_prefetch = 0 : i64, scratch_operands = 0 : i64, tpu.core_type = #tpu.core_type<tc>, window_params = [{transform_indices = @transform_0, window_bounds = array<i64: 1, 8, 32>}, {transform_indices = @transform_1, window_bounds = array<i64: 1, 8, 32>}, {transform_indices = @transform_2, window_bounds = array<i64: 1, 8, 32>}, {pipeline_mode = #tpu.pipeline_mode<synchronous>, transform_indices = @transform_3, window_bounds = array<i64: 32, 32>}, {pipeline_mode = #tpu.pipeline_mode<synchronous>, transform_indices = @transform_4, window_bounds = array<i64: 1, 32>}, {pipeline_mode = #tpu.pipeline_mode<synchronous>, transform_indices = @transform_5, window_bounds = array<i64: 32, 32>}, {pipeline_mode = #tpu.pipeline_mode<synchronous>, transform_indices = @transform_6, window_bounds = array<i64: 1, 32>}, {pipeline_mode = #tpu.pipeline_mode<synchronous>, transform_indices = @transform_7, window_bounds = array<i64: 32, 32>}, {pipeline_mode = #tpu.pipeline_mode<synchronous>, transform_indices = @transform_8, window_bounds = array<i64: 1, 32>}, {pipeline_mode = #tpu.pipeline_mode<synchronous>, transform_indices = @transform_9, window_bounds = array<i64: 32, 32>}, {pipeline_mode = #tpu.pipeline_mode<synchronous>, transform_indices = @transform_10, window_bounds = array<i64: 1, 32>}, {transform_indices = @transform_11, window_bounds = array<i64: 1, 8, 32>}, {transform_indices = @transform_12, window_bounds = array<i64: 1, 8, 8>}]} {
    %c0 = arith.constant 0 : index
    %c0_0 = arith.constant 0 : index
    %c0_1 = arith.constant 0 : index
    %0 = vector.load %arg1[%c0, %c0_0, %c0_1] : memref<1x8x32xf32, #tpu.memory_space<vmem>>, vector<1x8x32xf32>
    %1 = vector.shape_cast %0 : vector<1x8x32xf32> to vector<8x32xf32>
    %2 = arith.truncf %1 : vector<8x32xf32> to vector<8x32xbf16>
    %c0_2 = arith.constant 0 : index
    %c0_3 = arith.constant 0 : index
    %c0_4 = arith.constant 0 : index
    %3 = vector.load %arg2[%c0_2, %c0_3, %c0_4] : memref<1x8x32xf32, #tpu.memory_space<vmem>>, vector<1x8x32xf32>
    %4 = vector.shape_cast %3 : vector<1x8x32xf32> to vector<8x32xf32>
    %5 = arith.truncf %4 : vector<8x32xf32> to vector<8x32xbf16>
    %c0_5 = arith.constant 0 : index
    %c0_6 = arith.constant 0 : index
    %c0_7 = arith.constant 0 : index
    %6 = vector.load %arg3[%c0_5, %c0_6, %c0_7] : memref<1x8x32xf32, #tpu.memory_space<vmem>>, vector<1x8x32xf32>
    %7 = vector.shape_cast %6 : vector<1x8x32xf32> to vector<8x32xf32>
    %8 = arith.truncf %7 : vector<8x32xf32> to vector<8x32xbf16>
    %c0_8 = arith.constant 0 : index
    %c0_9 = arith.constant 0 : index
    %9 = vector.load %arg4[%c0_8, %c0_9] : memref<32x32xbf16, #tpu.memory_space<vmem>>, vector<32x32xbf16>
    %cst = arith.constant dense<0.000000e+00> : vector<8x32xf32>
    %10 = tpu.matmul %2, %9, %cst {dimension_numbers = #tpu.dot_dimension_numbers<[1], [0], [0], [1], [0, 0, 1, 1], [], []>} : vector<8x32xbf16>, vector<32x32xbf16>, vector<8x32xf32> -> vector<8x32xf32>
    %c0_10 = arith.constant 0 : index
    %c0_11 = arith.constant 0 : index
    %11 = vector.load %arg5[%c0_10, %c0_11] : memref<1x32xf32, #tpu.memory_space<vmem>>, vector<1x32xf32>
    %12 = vector.broadcast %11 : vector<1x32xf32> to vector<8x32xf32>
    %13 = arith.addf %10, %12 : vector<8x32xf32>
    %c0_12 = arith.constant 0 : index
    %c0_13 = arith.constant 0 : index
    %14 = vector.load %arg6[%c0_12, %c0_13] : memref<32x32xbf16, #tpu.memory_space<vmem>>, vector<32x32xbf16>
    %cst_14 = arith.constant dense<0.000000e+00> : vector<8x32xf32>
    %15 = tpu.matmul %5, %14, %cst_14 {dimension_numbers = #tpu.dot_dimension_numbers<[1], [0], [0], [1], [0, 0, 1, 1], [], []>} : vector<8x32xbf16>, vector<32x32xbf16>, vector<8x32xf32> -> vector<8x32xf32>
    %c0_15 = arith.constant 0 : index
    %c0_16 = arith.constant 0 : index
    %16 = vector.load %arg7[%c0_15, %c0_16] : memref<1x32xf32, #tpu.memory_space<vmem>>, vector<1x32xf32>
    %17 = vector.broadcast %16 : vector<1x32xf32> to vector<8x32xf32>
    %18 = arith.addf %15, %17 : vector<8x32xf32>
    %c0_17 = arith.constant 0 : index
    %c0_18 = arith.constant 0 : index
    %19 = vector.load %arg8[%c0_17, %c0_18] : memref<32x32xbf16, #tpu.memory_space<vmem>>, vector<32x32xbf16>
    %cst_19 = arith.constant dense<0.000000e+00> : vector<8x32xf32>
    %20 = tpu.matmul %8, %19, %cst_19 {dimension_numbers = #tpu.dot_dimension_numbers<[1], [0], [0], [1], [0, 0, 1, 1], [], []>} : vector<8x32xbf16>, vector<32x32xbf16>, vector<8x32xf32> -> vector<8x32xf32>
    %c0_20 = arith.constant 0 : index
    %c0_21 = arith.constant 0 : index
    %21 = vector.load %arg9[%c0_20, %c0_21] : memref<1x32xf32, #tpu.memory_space<vmem>>, vector<1x32xf32>
    %22 = vector.broadcast %21 : vector<1x32xf32> to vector<8x32xf32>
    %23 = arith.addf %20, %22 : vector<8x32xf32>
    %24 = vector.shape_cast %13 : vector<8x32xf32> to vector<1x8x32xf32>
    %25 = arith.truncf %24 : vector<1x8x32xf32> to vector<1x8x32xbf16>
    %26 = vector.shape_cast %18 : vector<8x32xf32> to vector<1x8x32xf32>
    %27 = arith.truncf %26 : vector<1x8x32xf32> to vector<1x8x32xbf16>
    %28 = vector.shape_cast %23 : vector<8x32xf32> to vector<1x8x32xf32>
    %29 = arith.truncf %28 : vector<1x8x32xf32> to vector<1x8x32xbf16>
    "tpu.trace_start"() <{level = 10 : i32, message = "bqh,bkh->bqk"}> : () -> ()
    %cst_22 = arith.constant dense<0.000000e+00> : vector<1x8x8xf32>
    %30 = tpu.matmul %25, %27, %cst_22 {dimension_numbers = #tpu.dot_dimension_numbers<[2], [2], [1], [1], [0, 0, 0, 1, 1, 1], [0], [0]>} : vector<1x8x32xbf16>, vector<1x8x32xbf16>, vector<1x8x8xf32> -> vector<1x8x8xf32>
    "tpu.trace_stop"() : () -> ()
    %31 = tpu.iota {dimensions = array<i32: 0>} : vector<8x8xi32>
    %32 = tpu.iota {dimensions = array<i32: 1>} : vector<8x8xi32>
    %c2_i32 = arith.constant 2 : i32
    %33 = vector.broadcast %c2_i32 : i32 to vector<8x8xi32>
    %34 = arith.subi %31, %33 : vector<8x8xi32>
    %35 = arith.cmpi sge, %32, %34 : vector<8x8xi32>
    %c2_i32_23 = arith.constant 2 : i32
    %36 = vector.broadcast %c2_i32_23 : i32 to vector<8x8xi32>
    %37 = arith.addi %31, %36 : vector<8x8xi32>
    %38 = arith.cmpi sle, %32, %37 : vector<8x8xi32>
    %39 = arith.andi %35, %38 : vector<8x8xi1>
    %40 = vector.shape_cast %39 : vector<8x8xi1> to vector<1x8x8xi1>
    %cst_24 = arith.constant -1.000000e+30 : f32
    %41 = vector.broadcast %cst_24 : f32 to vector<1x8x8xf32>
    %42 = arith.select %40, %30, %41 : vector<1x8x8xi1>, vector<1x8x8xf32>
    %cst_25 = arith.constant dense<0xFF800000> : vector<1x8xf32>
    %43 = vector.multi_reduction <maximumf>, %42, %cst_25 [2] : vector<1x8x8xf32> to vector<1x8xf32>
    %44 = vector.shape_cast %43 : vector<1x8xf32> to vector<1x8x1xf32>
    %45 = vector.broadcast %44 : vector<1x8x1xf32> to vector<1x8x8xf32>
    %46 = arith.subf %42, %45 : vector<1x8x8xf32>
    %47 = math.exp %46 : vector<1x8x8xf32>
    %cst_26 = arith.constant dense<0.000000e+00> : vector<1x8xf32>
    %48 = vector.multi_reduction <add>, %47, %cst_26 [2] : vector<1x8x8xf32> to vector<1x8xf32>
    %49 = vector.shape_cast %48 : vector<1x8xf32> to vector<1x8x1xf32>
    %50 = vector.broadcast %49 : vector<1x8x1xf32> to vector<1x8x8xf32>
    %51 = arith.divf %47, %50 : vector<1x8x8xf32>
    %52 = arith.truncf %51 : vector<1x8x8xf32> to vector<1x8x8xbf16>
    "tpu.trace_start"() <{level = 10 : i32, message = "bqk,bkh->bqh"}> : () -> ()
    %cst_27 = arith.constant dense<0.000000e+00> : vector<1x8x32xf32>
    %53 = tpu.matmul %52, %29, %cst_27 {dimension_numbers = #tpu.dot_dimension_numbers<[2], [1], [1], [2], [0, 0, 0, 1, 1, 2], [0], [0]>} : vector<1x8x8xbf16>, vector<1x8x32xbf16>, vector<1x8x32xf32> -> vector<1x8x32xf32>
    "tpu.trace_stop"() : () -> ()
    %54 = vector.shape_cast %53 : vector<1x8x32xf32> to vector<8x32xf32>
    %55 = arith.truncf %54 : vector<8x32xf32> to vector<8x32xbf16>
    %c0_28 = arith.constant 0 : index
    %c0_29 = arith.constant 0 : index
    %56 = vector.load %arg10[%c0_28, %c0_29] : memref<32x32xbf16, #tpu.memory_space<vmem>>, vector<32x32xbf16>
    %cst_30 = arith.constant dense<0.000000e+00> : vector<8x32xf32>
    %57 = tpu.matmul %55, %56, %cst_30 {dimension_numbers = #tpu.dot_dimension_numbers<[1], [0], [0], [1], [0, 0, 1, 1], [], []>} : vector<8x32xbf16>, vector<32x32xbf16>, vector<8x32xf32> -> vector<8x32xf32>
    %c0_31 = arith.constant 0 : index
    %c0_32 = arith.constant 0 : index
    %58 = vector.load %arg11[%c0_31, %c0_32] : memref<1x32xf32, #tpu.memory_space<vmem>>, vector<1x32xf32>
    %59 = vector.broadcast %58 : vector<1x32xf32> to vector<8x32xf32>
    %60 = arith.addf %57, %59 : vector<8x32xf32>
    %61 = vector.shape_cast %60 : vector<8x32xf32> to vector<1x8x32xf32>
    %c0_33 = arith.constant 0 : index
    %c0_34 = arith.constant 0 : index
    %c0_35 = arith.constant 0 : index
    %62 = vector.load %arg12[%c0_33, %c0_34, %c0_35] : memref<1x8x32xf32, #tpu.memory_space<vmem>>, vector<1x8x32xf32>
    tpu.vector_store %arg12[%c0_33, %c0_34, %c0_35], %61 {strides = array<i32>} : memref<1x8x32xf32, #tpu.memory_space<vmem>>, vector<1x8x32xf32>,
    %c0_36 = arith.constant 0 : index
    %c0_37 = arith.constant 0 : index
    %c0_38 = arith.constant 0 : index
    %63 = vector.load %arg13[%c0_36, %c0_37, %c0_38] : memref<1x8x8xf32, #tpu.memory_space<vmem>>, vector<1x8x8xf32>
    tpu.vector_store %arg13[%c0_36, %c0_37, %c0_38], %51 {strides = array<i32>} : memref<1x8x8xf32, #tpu.memory_space<vmem>>, vector<1x8x8xf32>,
    return
  }
  func.func @transform_0(%arg0: i32) -> (i32, i32, i32) {
    %c0_i32 = arith.constant 0 : i32
    %c0_i32_0 = arith.constant 0 : i32
    %c0_i32_1 = arith.constant 0 : i32
    return %arg0, %c0_i32, %c0_i32_0 : i32, i32, i32
  }
  func.func @transform_1(%arg0: i32) -> (i32, i32, i32) {
    %c0_i32 = arith.constant 0 : i32
    %c0_i32_0 = arith.constant 0 : i32
    %c0_i32_1 = arith.constant 0 : i32
    return %arg0, %c0_i32, %c0_i32_0 : i32, i32, i32
  }
  func.func @transform_2(%arg0: i32) -> (i32, i32, i32) {
    %c0_i32 = arith.constant 0 : i32
    %c0_i32_0 = arith.constant 0 : i32
    %c0_i32_1 = arith.constant 0 : i32
    return %arg0, %c0_i32, %c0_i32_0 : i32, i32, i32
  }
  func.func @transform_3(%arg0: i32) -> (i32, i32) {
    %c0_i32 = arith.constant 0 : i32
    %c0_i32_0 = arith.constant 0 : i32
    %c0_i32_1 = arith.constant 0 : i32
    return %c0_i32, %c0_i32_0 : i32, i32
  }
  func.func @transform_4(%arg0: i32) -> (i32, i32) {
    %c0_i32 = arith.constant 0 : i32
    %c0_i32_0 = arith.constant 0 : i32
    %c0_i32_1 = arith.constant 0 : i32
    return %c0_i32, %c0_i32_0 : i32, i32
  }
  func.func @transform_5(%arg0: i32) -> (i32, i32) {
    %c0_i32 = arith.constant 0 : i32
    %c0_i32_0 = arith.constant 0 : i32
    %c0_i32_1 = arith.constant 0 : i32
    return %c0_i32, %c0_i32_0 : i32, i32
  }
  func.func @transform_6(%arg0: i32) -> (i32, i32) {
    %c0_i32 = arith.constant 0 : i32
    %c0_i32_0 = arith.constant 0 : i32
    %c0_i32_1 = arith.constant 0 : i32
    return %c0_i32, %c0_i32_0 : i32, i32
  }
  func.func @transform_7(%arg0: i32) -> (i32, i32) {
    %c0_i32 = arith.constant 0 : i32
    %c0_i32_0 = arith.constant 0 : i32
    %c0_i32_1 = arith.constant 0 : i32
    return %c0_i32, %c0_i32_0 : i32, i32
  }
  func.func @transform_8(%arg0: i32) -> (i32, i32) {
    %c0_i32 = arith.constant 0 : i32
    %c0_i32_0 = arith.constant 0 : i32
    %c0_i32_1 = arith.constant 0 : i32
    return %c0_i32, %c0_i32_0 : i32, i32
  }
  func.func @transform_9(%arg0: i32) -> (i32, i32) {
    %c0_i32 = arith.constant 0 : i32
    %c0_i32_0 = arith.constant 0 : i32
    %c0_i32_1 = arith.constant 0 : i32
    return %c0_i32, %c0_i32_0 : i32, i32
  }
  func.func @transform_10(%arg0: i32) -> (i32, i32) {
    %c0_i32 = arith.constant 0 : i32
    %c0_i32_0 = arith.constant 0 : i32
    %c0_i32_1 = arith.constant 0 : i32
    return %c0_i32, %c0_i32_0 : i32, i32
  }
  func.func @transform_11(%arg0: i32) -> (i32, i32, i32) {
    %c0_i32 = arith.constant 0 : i32
    %c0_i32_0 = arith.constant 0 : i32
    %c0_i32_1 = arith.constant 0 : i32
    return %arg0, %c0_i32, %c0_i32_0 : i32, i32, i32
  }
  func.func @transform_12(%arg0: i32) -> (i32, i32, i32) {
    %c0_i32 = arith.constant 0 : i32
    %c0_i32_0 = arith.constant 0 : i32
    %c0_i32_1 = arith.constant 0 : i32
    return %arg0, %c0_i32, %c0_i32_0 : i32, i32, i32
  }
}

</mosaic_0001>

<llo_original>
// kernel: tpu_custom_call.1
$region0: #{tpu_custom_call.1}
  #allocation0 [shape = 'u32[]', space=smem, size = 0x4, offset = 0x4, fixed_abs, tag = 'smem constant byte address 0x4 - core index']
  #allocation1 [shape = 'u32[144,128]{1,0:T(1,128)}', space=vmem, size = 0x12000, scoped, tag = 'internal scratch']
  %s0 = inlined_call_operand.hbm [shape: f32[2,8,32], index: 0, kind: input, shape index: {}]
  %s1 = inlined_call_operand.hbm [shape: f32[2,8,32], index: 1, kind: input, shape index: {}]
  %s2 = inlined_call_operand.hbm [shape: f32[2,8,32], index: 2, kind: input, shape index: {}]
  %s3 = inlined_call_operand.hbm [shape: bf16[32,32], index: 3, kind: input, shape index: {}]
  %s4 = inlined_call_operand.hbm [shape: f32[1,32], index: 4, kind: input, shape index: {}]
  %s5 = inlined_call_operand.hbm [shape: bf16[32,32], index: 5, kind: input, shape index: {}]
  %s6 = inlined_call_operand.hbm [shape: f32[1,32], index: 6, kind: input, shape index: {}]
  %s7 = inlined_call_operand.hbm [shape: bf16[32,32], index: 7, kind: input, shape index: {}]
  %s8 = inlined_call_operand.hbm [shape: f32[1,32], index: 8, kind: input, shape index: {}]
  %s9 = inlined_call_operand.vmem [shape: bf16[32,32], index: 9, kind: input, shape index: {}]
  %s10 = inlined_call_operand.vmem [shape: f32[1,32], index: 10, kind: input, shape index: {}]
  %s11 = inlined_call_operand.hbm [shape: f32[2,8,32], index: 11, kind: output, shape index: {0}]
  %s12 = inlined_call_operand.hbm [shape: f32[2,8,8], index: 12, kind: output, shape index: {1}]
  %13 = xla_tuple %s11, %s12
  %s14 = sld [smem:[#allocation0]]
  $region121: #{tpu_custom_call.1} parent=0
    _
  %s16 = ssub.s32 1, %s14
  %s17 = scalar_select 0, %s16, %s14
  $region1: #{tpu_custom_call.1} parent=0
    #allocation2 [shape = 'u8[8192]{0}', space=vmem, size = 0x2000, scoped, tag = 'input window, operand 0']
    #allocation3 [shape = 's32[2]{0}', space=sflag, size = 0x8, scoped, tag = 'scoped memory for tpu_custom_call.1']
    #allocation4 [shape = 's32[2]{0}', space=sflag, size = 0x8, scoped, tag = 'scoped memory for tpu_custom_call.1']
    #allocation5 [shape = 'u8[8192]{0}', space=vmem, size = 0x2000, scoped, tag = 'input window, operand 1']
    #allocation6 [shape = 's32[2]{0}', space=sflag, size = 0x8, scoped, tag = 'scoped memory for tpu_custom_call.1']
    #allocation7 [shape = 'u8[8192]{0}', space=vmem, size = 0x2000, scoped, tag = 'input window, operand 2']
    #allocation8 [shape = 'u8[8192]{0}', space=vmem, size = 0x2000, scoped, tag = 'input window, operand 3, single buffered']
    #allocation9 [shape = 's32[1]{0}', space=sflag, size = 0x4, scoped, tag = 'scoped memory for tpu_custom_call.1']
    #allocation10 [shape = 'u8[512]{0}', space=vmem, size = 0x400, scoped, tag = 'input window, operand 4, single buffered']
    #allocation11 [shape = 'u8[8192]{0}', space=vmem, size = 0x2000, scoped, tag = 'input window, operand 5, single buffered']
    #allocation12 [shape = 's32[1]{0}', space=sflag, size = 0x4, scoped, tag = 'scoped memory for tpu_custom_call.1']
    #allocation13 [shape = 'u8[512]{0}', space=vmem, size = 0x400, scoped, tag = 'input window, operand 6, single buffered']
    #allocation14 [shape = 'u8[8192]{0}', space=vmem, size = 0x2000, scoped, tag = 'input window, operand 7, single buffered']
    #allocation15 [shape = 's32[1]{0}', space=sflag, size = 0x4, scoped, tag = 'scoped memory for tpu_custom_call.1']
    #allocation16 [shape = 'u8[512]{0}', space=vmem, size = 0x400, scoped, tag = 'input window, operand 8, single buffered']
    #allocation17 [shape = 'u8[8192]{0}', space=vmem, size = 0x2000, scoped, tag = 'output window, operand 0']
    #allocation18 [shape = 'u8[8192]{0}', space=vmem, size = 0x2000, scoped, tag = 'output window, operand 1']
    #allocation19 [shape = 's32[2]{0}', space=sflag, size = 0x8, scoped, tag = 'scoped memory for tpu_custom_call.1']
    %18 = vsyncpa [#allocation3], 0
    %s19 = scalar_lea.sflag [#allocation3], 1
    %20 = vsyncpa %s19, 0
    %21 = vsyncpa [#allocation6], 0
    %s22 = scalar_lea.sflag [#allocation6], 1
    %23 = vsyncpa %s22, 0
    %24 = vsyncpa [#allocation9], 0
    %25 = vsyncpa [#allocation12], 0
    %26 = vsyncpa [#allocation15], 0
    %27 = vsyncpa [#allocation4], 0
    %s28 = scalar_lea.sflag [#allocation4], 1
    %29 = vsyncpa %s28, 0
    %30 = vsyncpa [#allocation19], 0
    %s31 = scalar_lea.sflag [#allocation19], 1
    %32 = vsyncpa %s31, 0
    loop: start=0, step=1, limit=4
    $region2: #{tpu_custom_call.1} parent=1 // loop_pre_header
      _
    $region3: #{tpu_custom_call.1} parent=1 // loop_header
      %s34 = sphi 0, %s38
      %p35 = scmp.ge.s32.totalorder %s34, 4
      %s44 = sphi 0, %s46
      %s47 = sphi 0, %s44
      %s48 = sphi 0, %s47
      %s64 = sphi 0, %s48
      %s70 = sphi 0, %s72
      %s73 = sphi 0, %s70
      %s74 = sphi 0, %s73
      %s90 = sphi 0, %s74
      %s96 = sphi 0, %s98
      %s99 = sphi 0, %s96
      %s100 = sphi 0, %s99
      %s116 = sphi 0, %s100
      %s120 = sphi 0, %s120
      %s122 = sphi 0, %s120
      %s123 = sphi 0, %s122
      %s137 = sphi 0, %s123
      %s141 = sphi 0, %s141
      %s143 = sphi 0, %s141
      %s144 = sphi 0, %s143
      %s158 = sphi 0, %s144
      %s162 = sphi 0, %s162
      %s164 = sphi 0, %s162
      %s165 = sphi 0, %s164
      %s179 = sphi 0, %s165
      %s183 = sphi 0, %s183
      %s185 = sphi 0, %s183
      %s186 = sphi 0, %s185
      %s200 = sphi 0, %s186
      %s204 = sphi 0, %s204
      %s206 = sphi 0, %s204
      %s207 = sphi 0, %s206
      %s221 = sphi 0, %s207
      %s225 = sphi 0, %s225
      %s227 = sphi 0, %s225
      %s228 = sphi 0, %s227
      %s242 = sphi 0, %s228
      %s246 = sphi 0, %s246
      %s248 = sphi 0, %s246
      %s249 = sphi 0, %s248
      %s263 = sphi 0, %s249
      %s267 = sphi 0, %s267
      %s269 = sphi 0, %s267
      %s270 = sphi 0, %s269
      %s284 = sphi 0, %s270
      %s290 = sphi 0, %s292
      %s293 = sphi 0, %s290
      %s294 = sphi 0, %s293
      %s310 = sphi 0, %s294
      %s316 = sphi 0, %s318
      %s319 = sphi 0, %s316
      %s320 = sphi 0, %s319
      %s336 = sphi 0, %s320
    $region4: #{tpu_custom_call.1} parent=1 // loop_header_branch
      %37 = sbr.rel (%p35) target = $region8
    $region5: #{tpu_custom_call.1} parent=1 // loop_body
      %s39 = ssub.s32 %s34, 1
      %s40 = ssub.s32 %s34, 2
      %s41 = sadd.s32 %s34, 1
      %s42 = ssub.s32 %s34, %s41
      %p43 = scmp.eq.s32.totalorder %s42, 0
      %s45 = sadd.s32 %s44, 1
      %s46 = scalar_select %p43, %s44, %s45
      %p49 = pneg %p43
      %p50 = scmp.eq.s32.totalorder %s34, 1
      %p51 = por %p49, %p50
      %p52 = scmp.ne.s32.totalorder %s44, %s47
      %p53 = scmp.eq.s32.totalorder %s34, 0
      %p54 = por %p52, %p53
      %p55 = scmp.ne.s32.totalorder %s44, %s47
      %p56 = scmp.eq.s32.totalorder %s39, 1
      %p57 = por %p55, %p56
      %p58 = scmp.ne.s32.totalorder %s47, %s48
      %p59 = scmp.eq.s32.totalorder %s39, 0
      %p60 = por %p58, %p59
      %p61 = scmp.ne.s32.totalorder %s47, %s48
      %p62 = scmp.eq.s32.totalorder %s40, 1
      %p63 = por %p61, %p62
      %p65 = scmp.ne.s32.totalorder %s48, %s64
      %p66 = scmp.eq.s32.totalorder %s40, 0
      %p67 = por %p65, %p66
      %s68 = ssub.s32 %s34, %s41
      %p69 = scmp.eq.s32.totalorder %s68, 0
      %s71 = sadd.s32 %s70, 1
      %s72 = scalar_select %p69, %s70, %s71
      %p75 = pneg %p69
      %p76 = scmp.eq.s32.totalorder %s34, 1
      %p77 = por %p75, %p76
      %p78 = scmp.ne.s32.totalorder %s70, %s73
      %p79 = scmp.eq.s32.totalorder %s34, 0
      %p80 = por %p78, %p79
      %p81 = scmp.ne.s32.totalorder %s70, %s73
      %p82 = scmp.eq.s32.totalorder %s39, 1
      %p83 = por %p81, %p82
      %p84 = scmp.ne.s32.totalorder %s73, %s74
      %p85 = scmp.eq.s32.totalorder %s39, 0
      %p86 = por %p84, %p85
      %p87 = scmp.ne.s32.totalorder %s73, %s74
      %p88 = scmp.eq.s32.totalorder %s40, 1
      %p89 = por %p87, %p88
      %p91 = scmp.ne.s32.totalorder %s74, %s90
      %p92 = scmp.eq.s32.totalorder %s40, 0
      %p93 = por %p91, %p92
      %s94 = ssub.s32 %s34, %s41
      %p95 = scmp.eq.s32.totalorder %s94, 0
      %s97 = sadd.s32 %s96, 1
      %s98 = scalar_select %p95, %s96, %s97
      %p101 = pneg %p95
      %p102 = scmp.eq.s32.totalorder %s34, 1
      %p103 = por %p101, %p102
      %p104 = scmp.ne.s32.totalorder %s96, %s99
      %p105 = scmp.eq.s32.totalorder %s34, 0
      %p106 = por %p104, %p105
      %p107 = scmp.ne.s32.totalorder %s96, %s99
      %p108 = scmp.eq.s32.totalorder %s39, 1
      %p109 = por %p107, %p108
      %p110 = scmp.ne.s32.totalorder %s99, %s100
      %p111 = scmp.eq.s32.totalorder %s39, 0
      %p112 = por %p110, %p111
      %p113 = scmp.ne.s32.totalorder %s99, %s100
      %p114 = scmp.eq.s32.totalorder %s40, 1
      %p115 = por %p113, %p114
      %p117 = scmp.ne.s32.totalorder %s100, %s116
      %p118 = scmp.eq.s32.totalorder %s40, 0
      %p119 = por %p117, %p118
      %s121 = sadd.s32 %s120, 1
      %p124 = scmp.eq.s32.totalorder %s34, 1
      %p125 = scmp.ne.s32.totalorder %s120, %s122
      %p126 = scmp.eq.s32.totalorder %s34, 0
      %p127 = por %p125, %p126
      %p128 = scmp.ne.s32.totalorder %s120, %s122
      %p129 = scmp.eq.s32.totalorder %s39, 1
      %p130 = por %p128, %p129
      %p131 = scmp.ne.s32.totalorder %s122, %s123
      %p132 = scmp.eq.s32.totalorder %s39, 0
      %p133 = por %p131, %p132
      %p134 = scmp.ne.s32.totalorder %s122, %s123
      %p135 = scmp.eq.s32.totalorder %s40, 1
      %p136 = por %p134, %p135
      %p138 = scmp.ne.s32.totalorder %s123, %s137
      %p139 = scmp.eq.s32.totalorder %s40, 0
      %p140 = por %p138, %p139
      %s142 = sadd.s32 %s141, 1
      %p145 = scmp.eq.s32.totalorder %s34, 1
      %p146 = scmp.ne.s32.totalorder %s141, %s143
      %p147 = scmp.eq.s32.totalorder %s34, 0
      %p148 = por %p146, %p147
      %p149 = scmp.ne.s32.totalorder %s141, %s143
      %p150 = scmp.eq.s32.totalorder %s39, 1
      %p151 = por %p149, %p150
      %p152 = scmp.ne.s32.totalorder %s143, %s144
      %p153 = scmp.eq.s32.totalorder %s39, 0
      %p154 = por %p152, %p153
      %p155 = scmp.ne.s32.totalorder %s143, %s144
      %p156 = scmp.eq.s32.totalorder %s40, 1
      %p157 = por %p155, %p156
      %p159 = scmp.ne.s32.totalorder %s144, %s158
      %p160 = scmp.eq.s32.totalorder %s40, 0
      %p161 = por %p159, %p160
      %s163 = sadd.s32 %s162, 1
      %p166 = scmp.eq.s32.totalorder %s34, 1
      %p167 = scmp.ne.s32.totalorder %s162, %s164
      %p168 = scmp.eq.s32.totalorder %s34, 0
      %p169 = por %p167, %p168
      %p170 = scmp.ne.s32.totalorder %s162, %s164
      %p171 = scmp.eq.s32.totalorder %s39, 1
      %p172 = por %p170, %p171
      %p173 = scmp.ne.s32.totalorder %s164, %s165
      %p174 = scmp.eq.s32.totalorder %s39, 0
      %p175 = por %p173, %p174
      %p176 = scmp.ne.s32.totalorder %s164, %s165
      %p177 = scmp.eq.s32.totalorder %s40, 1
      %p178 = por %p176, %p177
      %p180 = scmp.ne.s32.totalorder %s165, %s179
      %p181 = scmp.eq.s32.totalorder %s40, 0
      %p182 = por %p180, %p181
      %s184 = sadd.s32 %s183, 1
      %p187 = scmp.eq.s32.totalorder %s34, 1
      %p188 = scmp.ne.s32.totalorder %s183, %s185
      %p189 = scmp.eq.s32.totalorder %s34, 0
      %p190 = por %p188, %p189
      %p191 = scmp.ne.s32.totalorder %s183, %s185
      %p192 = scmp.eq.s32.totalorder %s39, 1
      %p193 = por %p191, %p192
      %p194 = scmp.ne.s32.totalorder %s185, %s186
      %p195 = scmp.eq.s32.totalorder %s39, 0
      %p196 = por %p194, %p195
      %p197 = scmp.ne.s32.totalorder %s185, %s186
      %p198 = scmp.eq.s32.totalorder %s40, 1
      %p199 = por %p197, %p198
      %p201 = scmp.ne.s32.totalorder %s186, %s200
      %p202 = scmp.eq.s32.totalorder %s40, 0
      %p203 = por %p201, %p202
      %s205 = sadd.s32 %s204, 1
      %p208 = scmp.eq.s32.totalorder %s34, 1
      %p209 = scmp.ne.s32.totalorder %s204, %s206
      %p210 = scmp.eq.s32.totalorder %s34, 0
      %p211 = por %p209, %p210
      %p212 = scmp.ne.s32.totalorder %s204, %s206
      %p213 = scmp.eq.s32.totalorder %s39, 1
      %p214 = por %p212, %p213
      %p215 = scmp.ne.s32.totalorder %s206, %s207
      %p216 = scmp.eq.s32.totalorder %s39, 0
      %p217 = por %p215, %p216
      %p218 = scmp.ne.s32.totalorder %s206, %s207
      %p219 = scmp.eq.s32.totalorder %s40, 1
      %p220 = por %p218, %p219
      %p222 = scmp.ne.s32.totalorder %s207, %s221
      %p223 = scmp.eq.s32.totalorder %s40, 0
      %p224 = por %p222, %p223
      %s226 = sadd.s32 %s225, 1
      %p229 = scmp.eq.s32.totalorder %s34, 1
      %p230 = scmp.ne.s32.totalorder %s225, %s227
      %p231 = scmp.eq.s32.totalorder %s34, 0
      %p232 = por %p230, %p231
      %p233 = scmp.ne.s32.totalorder %s225, %s227
      %p234 = scmp.eq.s32.totalorder %s39, 1
      %p235 = por %p233, %p234
      %p236 = scmp.ne.s32.totalorder %s227, %s228
      %p237 = scmp.eq.s32.totalorder %s39, 0
      %p238 = por %p236, %p237
      %p239 = scmp.ne.s32.totalorder %s227, %s228
      %p240 = scmp.eq.s32.totalorder %s40, 1
      %p241 = por %p239, %p240
      %p243 = scmp.ne.s32.totalorder %s228, %s242
      %p244 = scmp.eq.s32.totalorder %s40, 0
      %p245 = por %p243, %p244
      %s247 = sadd.s32 %s246, 1
      %p250 = scmp.eq.s32.totalorder %s34, 1
      %p251 = scmp.ne.s32.totalorder %s246, %s248
      %p252 = scmp.eq.s32.totalorder %s34, 0
      %p253 = por %p251, %p252
      %p254 = scmp.ne.s32.totalorder %s246, %s248
      %p255 = scmp.eq.s32.totalorder %s39, 1
      %p256 = por %p254, %p255
      %p257 = scmp.ne.s32.totalorder %s248, %s249
      %p258 = scmp.eq.s32.totalorder %s39, 0
      %p259 = por %p257, %p258
      %p260 = scmp.ne.s32.totalorder %s248, %s249
      %p261 = scmp.eq.s32.totalorder %s40, 1
      %p262 = por %p260, %p261
      %p264 = scmp.ne.s32.totalorder %s249, %s263
      %p265 = scmp.eq.s32.totalorder %s40, 0
      %p266 = por %p264, %p265
      %s268 = sadd.s32 %s267, 1
      %p271 = scmp.eq.s32.totalorder %s34, 1
      %p272 = scmp.ne.s32.totalorder %s267, %s269
      %p273 = scmp.eq.s32.totalorder %s34, 0
      %p274 = por %p272, %p273
      %p275 = scmp.ne.s32.totalorder %s267, %s269
      %p276 = scmp.eq.s32.totalorder %s39, 1
      %p277 = por %p275, %p276
      %p278 = scmp.ne.s32.totalorder %s269, %s270
      %p279 = scmp.eq.s32.totalorder %s39, 0
      %p280 = por %p278, %p279
      %p281 = scmp.ne.s32.totalorder %s269, %s270
      %p282 = scmp.eq.s32.totalorder %s40, 1
      %p283 = por %p281, %p282
      %p285 = scmp.ne.s32.totalorder %s270, %s284
      %p286 = scmp.eq.s32.totalorder %s40, 0
      %p287 = por %p285, %p286
      %s288 = ssub.s32 %s34, %s41
      %p289 = scmp.eq.s32.totalorder %s288, 0
      %s291 = sadd.s32 %s290, 1
      %s292 = scalar_select %p289, %s290, %s291
      %p295 = pneg %p289
      %p296 = scmp.eq.s32.totalorder %s34, 1
      %p297 = por %p295, %p296
      %p298 = scmp.ne.s32.totalorder %s290, %s293
      %p299 = scmp.eq.s32.totalorder %s34, 0
      %p300 = por %p298, %p299
      %p301 = scmp.ne.s32.totalorder %s290, %s293
      %p302 = scmp.eq.s32.totalorder %s39, 1
      %p303 = por %p301, %p302
      %p304 = scmp.ne.s32.totalorder %s293, %s294
      %p305 = scmp.eq.s32.totalorder %s39, 0
      %p306 = por %p304, %p305
      %p307 = scmp.ne.s32.totalorder %s293, %s294
      %p308 = scmp.eq.s32.totalorder %s40, 1
      %p309 = por %p307, %p308
      %p311 = scmp.ne.s32.totalorder %s294, %s310
      %p312 = scmp.eq.s32.totalorder %s40, 0
      %p313 = por %p311, %p312
      %s314 = ssub.s32 %s34, %s41
      %p315 = scmp.eq.s32.totalorder %s314, 0
      %s317 = sadd.s32 %s316, 1
      %s318 = scalar_select %p315, %s316, %s317
      %p321 = pneg %p315
      %p322 = scmp.eq.s32.totalorder %s34, 1
      %p323 = por %p321, %p322
      %p324 = scmp.ne.s32.totalorder %s316, %s319
      %p325 = scmp.eq.s32.totalorder %s34, 0
      %p326 = por %p324, %p325
      %p327 = scmp.ne.s32.totalorder %s316, %s319
      %p328 = scmp.eq.s32.totalorder %s39, 1
      %p329 = por %p327, %p328
      %p330 = scmp.ne.s32.totalorder %s319, %s320
      %p331 = scmp.eq.s32.totalorder %s39, 0
      %p332 = por %p330, %p331
      %p333 = scmp.ne.s32.totalorder %s319, %s320
      %p334 = scmp.eq.s32.totalorder %s40, 1
      %p335 = por %p333, %p334
      %p337 = scmp.ne.s32.totalorder %s320, %s336
      %p338 = scmp.eq.s32.totalorder %s40, 0
      %p339 = por %p337, %p338
      %p340 = scmp.le.s32.totalorder 1, %s34
      %p341 = scmp.lt.s32.totalorder %s34, 3
      %p342 = pnand %p340, %p341
      %p343 = pneg %p342
      // Predicated region
      $region9: #{tpu_custom_call.1} parent=5 // pred_check
        _
      $region10: #{tpu_custom_call.1} parent=5 // pred_check_branch
        %345 = sbr.rel (%p342) target = $region12
      $region11: #{tpu_custom_call.1} parent=5 // pred_region
        %s346 = ssub.s32 %s34, 1
        // Predicated region
        $region13: #{tpu_custom_call.1} parent=11 // pred_check
          %p347 = pneg %p133
        $region14: #{tpu_custom_call.1} parent=11 // pred_check_branch
          %349 = sbr.rel (%p347) target = $region16
        $region15: #{tpu_custom_call.1} parent=11 // pred_region
          %s351 = ssub.s32 256, 256
          %352 = vsyncadd [#allocation9], %s351
          %s353 = sshll.u32 [#allocation8], 4
          %s354 = int_to_ptr.vmem [resolvable:$true] %s353
          %359 = dma.hbm_to_vmem [thread:$0]  %s3, 256, %s354, [#allocation9], 64, 64, 4
        $region16: #{tpu_custom_call.1} parent=11 // pred_fallthru
          _
        // Predicated region
        $region17: #{tpu_custom_call.1} parent=11 // pred_check
          %p360 = pneg %p154
        $region18: #{tpu_custom_call.1} parent=11 // pred_check_branch
          %362 = sbr.rel (%p360) target = $region20
        $region19: #{tpu_custom_call.1} parent=11 // pred_region
          %s364 = ssub.s32 16, 16
          %365 = vsyncadd [#allocation9], %s364
          %s367 = sshll.u32 [#allocation10], 4
          %s368 = int_to_ptr.vmem [resolvable:$true] %s367
          %370 = dma.hbm_to_vmem [thread:$0]  %s4, 16, %s368, [#allocation9]
        $region20: #{tpu_custom_call.1} parent=11 // pred_fallthru
          _
        // Predicated region
        $region21: #{tpu_custom_call.1} parent=11 // pred_check
          %p371 = pneg %p175
        $region22: #{tpu_custom_call.1} parent=11 // pred_check_branch
          %373 = sbr.rel (%p371) target = $region24
        $region23: #{tpu_custom_call.1} parent=11 // pred_region
          %s375 = ssub.s32 256, 256
          %376 = vsyncadd [#allocation12], %s375
          %s377 = sshll.u32 [#allocation11], 4
          %s378 = int_to_ptr.vmem [resolvable:$true] %s377
          %383 = dma.hbm_to_vmem [thread:$0]  %s5, 256, %s378, [#allocation12], 64, 64, 4
        $region24: #{tpu_custom_call.1} parent=11 // pred_fallthru
          _
        // Predicated region
        $region25: #{tpu_custom_call.1} parent=11 // pred_check
          %p384 = pneg %p196
        $region26: #{tpu_custom_call.1} parent=11 // pred_check_branch
          %386 = sbr.rel (%p384) target = $region28
        $region27: #{tpu_custom_call.1} parent=11 // pred_region
          %s388 = ssub.s32 16, 16
          %389 = vsyncadd [#allocation12], %s388
          %s391 = sshll.u32 [#allocation13], 4
          %s392 = int_to_ptr.vmem [resolvable:$true] %s391
          %394 = dma.hbm_to_vmem [thread:$0]  %s6, 16, %s392, [#allocation12]
        $region28: #{tpu_custom_call.1} parent=11 // pred_fallthru
          _
        // Predicated region
        $region29: #{tpu_custom_call.1} parent=11 // pred_check
          %p395 = pneg %p217
        $region30: #{tpu_custom_call.1} parent=11 // pred_check_branch
          %397 = sbr.rel (%p395) target = $region32
        $region31: #{tpu_custom_call.1} parent=11 // pred_region
          %s399 = ssub.s32 256, 256
          %400 = vsyncadd [#allocation15], %s399
          %s401 = sshll.u32 [#allocation14], 4
          %s402 = int_to_ptr.vmem [resolvable:$true] %s401
          %407 = dma.hbm_to_vmem [thread:$0]  %s7, 256, %s402, [#allocation15], 64, 64, 4
        $region32: #{tpu_custom_call.1} parent=11 // pred_fallthru
          _
        // Predicated region
        $region33: #{tpu_custom_call.1} parent=11 // pred_check
          %p408 = pneg %p238
        $region34: #{tpu_custom_call.1} parent=11 // pred_check_branch
          %410 = sbr.rel (%p408) target = $region36
        $region35: #{tpu_custom_call.1} parent=11 // pred_region
          %s412 = ssub.s32 16, 16
          %413 = vsyncadd [#allocation15], %s412
          %s415 = sshll.u32 [#allocation16], 4
          %s416 = int_to_ptr.vmem [resolvable:$true] %s415
          %418 = dma.hbm_to_vmem [thread:$0]  %s8, 16, %s416, [#allocation15]
        $region36: #{tpu_custom_call.1} parent=11 // pred_fallthru
          _
        // Predicated region
        $region37: #{tpu_custom_call.1} parent=11 // pred_check
          %p419 = pneg %p259
        $region38: #{tpu_custom_call.1} parent=11 // pred_check_branch
          %421 = sbr.rel (%p419) target = $region40
        $region39: #{tpu_custom_call.1} parent=11 // pred_region
          _
        $region40: #{tpu_custom_call.1} parent=11 // pred_fallthru
          _
        // Predicated region
        $region41: #{tpu_custom_call.1} parent=11 // pred_check
          %p422 = pneg %p280
        $region42: #{tpu_custom_call.1} parent=11 // pred_check_branch
          %424 = sbr.rel (%p422) target = $region44
        $region43: #{tpu_custom_call.1} parent=11 // pred_region
          _
        $region44: #{tpu_custom_call.1} parent=11 // pred_fallthru
          _
      $region12: #{tpu_custom_call.1} parent=5 // pred_fallthru
        _
      %p425 = scmp.lt.s32.totalorder %s34, 2
      // Predicated region
      $region45: #{tpu_custom_call.1} parent=5 // pred_check
        %p426 = pneg %p425
      $region46: #{tpu_custom_call.1} parent=5 // pred_check_branch
        %428 = sbr.rel (%p426) target = $region48
      $region47: #{tpu_custom_call.1} parent=5 // pred_region
        // Predicated region
        $region49: #{tpu_custom_call.1} parent=47 // pred_check
          %p429 = pneg %p54
        $region50: #{tpu_custom_call.1} parent=47 // pred_check_branch
          %431 = sbr.rel (%p429) target = $region52
        $region51: #{tpu_custom_call.1} parent=47 // pred_region
          %s432 = sand.u32 %s44, 1
          %s433 = scalar_lea.sflag [#allocation3], %s432
          %s434 = sand.u32 %s44, 1
          %s435 = smul.addr %s434, 8
          %s436 = scalar_lea.vmem [#allocation2], %s435
          %s438 = ssub.s32 128, 128
          %439 = vsyncadd %s433, %s438
          %s440 = smul.addr %s34, 128
          %s441 = scalar_lea.hbm %s0, %s440
          %s443 = sshll.u32 %s436, 4
          %s444 = int_to_ptr.vmem [resolvable:$true] %s443
          %446 = dma.hbm_to_vmem [thread:$0]  %s441, 128, %s444, %s433
        $region52: #{tpu_custom_call.1} parent=47 // pred_fallthru
          _
        // Predicated region
        $region53: #{tpu_custom_call.1} parent=47 // pred_check
          %p447 = pneg %p80
        $region54: #{tpu_custom_call.1} parent=47 // pred_check_branch
          %449 = sbr.rel (%p447) target = $region56
        $region55: #{tpu_custom_call.1} parent=47 // pred_region
          %s450 = sand.u32 %s34, 1
          %s451 = scalar_lea.sflag [#allocation6], %s450
          %s452 = sand.u32 %s70, 1
          %s453 = smul.addr %s452, 8
          %s454 = scalar_lea.vmem [#allocation5], %s453
          %s456 = ssub.s32 128, 128
          %457 = vsyncadd %s451, %s456
          %s458 = smul.addr %s34, 128
          %s459 = scalar_lea.hbm %s1, %s458
          %s461 = sshll.u32 %s454, 4
          %s462 = int_to_ptr.vmem [resolvable:$true] %s461
          %464 = dma.hbm_to_vmem [thread:$0]  %s459, 128, %s462, %s451
        $region56: #{tpu_custom_call.1} parent=47 // pred_fallthru
          _
        // Predicated region
        $region57: #{tpu_custom_call.1} parent=47 // pred_check
          %p465 = pneg %p106
        $region58: #{tpu_custom_call.1} parent=47 // pred_check_branch
          %467 = sbr.rel (%p465) target = $region60
        $region59: #{tpu_custom_call.1} parent=47 // pred_region
          %s468 = sand.u32 %s34, 1
          %s469 = scalar_lea.sflag [#allocation6], %s468
          %s470 = sand.u32 %s96, 1
          %s471 = smul.addr %s470, 8
          %s472 = scalar_lea.vmem [#allocation7], %s471
          %s474 = ssub.s32 128, 128
          %475 = vsyncadd %s469, %s474
          %s476 = smul.addr %s34, 128
          %s477 = scalar_lea.hbm %s2, %s476
          %s479 = sshll.u32 %s472, 4
          %s480 = int_to_ptr.vmem [resolvable:$true] %s479
          %482 = dma.hbm_to_vmem [thread:$0]  %s477, 128, %s480, %s469
        $region60: #{tpu_custom_call.1} parent=47 // pred_fallthru
          _
      $region48: #{tpu_custom_call.1} parent=5 // pred_fallthru
        _
      %p483 = scmp.le.s32.totalorder 1, %s34
      %p484 = scmp.lt.s32.totalorder %s34, 3
      %p485 = pnand %p483, %p484
      %p486 = pneg %p485
      // Predicated region
      $region61: #{tpu_custom_call.1} parent=5 // pred_check
        _
      $region62: #{tpu_custom_call.1} parent=5 // pred_check_branch
        %488 = sbr.rel (%p485) target = $region64
      $region63: #{tpu_custom_call.1} parent=5 // pred_region
        %s489 = ssub.s32 %s34, 1
        %s490 = sand.u32 %s47, 1
        %s491 = scalar_lea.sflag [#allocation3], %s490
        %s492 = sand.u32 %s47, 1
        %s493 = smul.addr %s492, 8
        %s494 = scalar_lea.vmem [#allocation2], %s493
        // Predicated region
        $region65: #{tpu_custom_call.1} parent=63 // pred_check
          %p495 = pneg %p60
        $region66: #{tpu_custom_call.1} parent=63 // pred_check_branch
          %497 = sbr.rel (%p495) target = $region68
        $region67: #{tpu_custom_call.1} parent=63 // pred_region
          %498 = dma.done %s491, 128
        $region68: #{tpu_custom_call.1} parent=63 // pred_fallthru
          _
        %s499 = sand.u32 %s39, 1
        %s500 = scalar_lea.sflag [#allocation6], %s499
        %s501 = sand.u32 %s73, 1
        %s502 = smul.addr %s501, 8
        %s503 = scalar_lea.vmem [#allocation5], %s502
        // Predicated region
        $region69: #{tpu_custom_call.1} parent=63 // pred_check
          %p504 = pneg %p86
        $region70: #{tpu_custom_call.1} parent=63 // pred_check_branch
          %506 = sbr.rel (%p504) target = $region72
        $region71: #{tpu_custom_call.1} parent=63 // pred_region
          %507 = dma.done %s500, 128
        $region72: #{tpu_custom_call.1} parent=63 // pred_fallthru
          _
        %s508 = sand.u32 %s39, 1
        %s509 = scalar_lea.sflag [#allocation6], %s508
        %s510 = sand.u32 %s99, 1
        %s511 = smul.addr %s510, 8
        %s512 = scalar_lea.vmem [#allocation7], %s511
        // Predicated region
        $region73: #{tpu_custom_call.1} parent=63 // pred_check
          %p513 = pneg %p112
        $region74: #{tpu_custom_call.1} parent=63 // pred_check_branch
          %515 = sbr.rel (%p513) target = $region76
        $region75: #{tpu_custom_call.1} parent=63 // pred_region
          %516 = dma.done %s509, 128
        $region76: #{tpu_custom_call.1} parent=63 // pred_fallthru
          _
        // Predicated region
        $region77: #{tpu_custom_call.1} parent=63 // pred_check
          %p517 = pneg %p133
        $region78: #{tpu_custom_call.1} parent=63 // pred_check_branch
          %519 = sbr.rel (%p517) target = $region80
        $region79: #{tpu_custom_call.1} parent=63 // pred_region
          %520 = dma.done [#allocation9], 256
        $region80: #{tpu_custom_call.1} parent=63 // pred_fallthru
          _
        // Predicated region
        $region81: #{tpu_custom_call.1} parent=63 // pred_check
          %p521 = pneg %p154
        $region82: #{tpu_custom_call.1} parent=63 // pred_check_branch
          %523 = sbr.rel (%p521) target = $region84
        $region83: #{tpu_custom_call.1} parent=63 // pred_region
          %524 = dma.done [#allocation9], 16
        $region84: #{tpu_custom_call.1} parent=63 // pred_fallthru
          _
        // Predicated region
        $region85: #{tpu_custom_call.1} parent=63 // pred_check
          %p525 = pneg %p175
        $region86: #{tpu_custom_call.1} parent=63 // pred_check_branch
          %527 = sbr.rel (%p525) target = $region88
        $region87: #{tpu_custom_call.1} parent=63 // pred_region
          %528 = dma.done [#allocation12], 256
        $region88: #{tpu_custom_call.1} parent=63 // pred_fallthru
          _
        // Predicated region
        $region89: #{tpu_custom_call.1} parent=63 // pred_check
          %p529 = pneg %p196
        $region90: #{tpu_custom_call.1} parent=63 // pred_check_branch
          %531 = sbr.rel (%p529) target = $region92
        $region91: #{tpu_custom_call.1} parent=63 // pred_region
          %532 = dma.done [#allocation12], 16
        $region92: #{tpu_custom_call.1} parent=63 // pred_fallthru
          _
        // Predicated region
        $region93: #{tpu_custom_call.1} parent=63 // pred_check
          %p533 = pneg %p217
        $region94: #{tpu_custom_call.1} parent=63 // pred_check_branch
          %535 = sbr.rel (%p533) target = $region96
        $region95: #{tpu_custom_call.1} parent=63 // pred_region
          %536 = dma.done [#allocation15], 256
        $region96: #{tpu_custom_call.1} parent=63 // pred_fallthru
          _
        // Predicated region
        $region97: #{tpu_custom_call.1} parent=63 // pred_check
          %p537 = pneg %p238
        $region98: #{tpu_custom_call.1} parent=63 // pred_check_branch
          %539 = sbr.rel (%p537) target = $region100
        $region99: #{tpu_custom_call.1} parent=63 // pred_region
          %540 = dma.done [#allocation15], 16
        $region100: #{tpu_custom_call.1} parent=63 // pred_fallthru
          _
        %s541 = sand.u32 %s47, 1
        %s542 = scalar_lea.sflag [#allocation3], %s541
        %s543 = sand.u32 %s47, 1
        %s544 = smul.addr %s543, 8
        %s545 = scalar_lea.vmem [#allocation2], %s544
        %p546 = pneg %p60
        %p547 = pneg %p57
        %s548 = sand.u32 %s39, 1
        %s549 = scalar_lea.sflag [#allocation6], %s548
        %s550 = sand.u32 %s73, 1
        %s551 = smul.addr %s550, 8
        %s552 = scalar_lea.vmem [#allocation5], %s551
        %p553 = pneg %p86
        %p554 = pneg %p83
        %s555 = sand.u32 %s39, 1
        %s556 = scalar_lea.sflag [#allocation6], %s555
        %s557 = sand.u32 %s99, 1
        %s558 = smul.addr %s557, 8
        %s559 = scalar_lea.vmem [#allocation7], %s558
        %p560 = pneg %p112
        %p561 = pneg %p109
        %p562 = pneg %p133
        %p563 = pneg %p130
        %p564 = pneg %p154
        %p565 = pneg %p151
        %p566 = pneg %p175
        %p567 = pneg %p172
        %p568 = pneg %p196
        %p569 = pneg %p193
        %p570 = pneg %p217
        %p571 = pneg %p214
        %p572 = pneg %p238
        %p573 = pneg %p235
        %p574 = pneg %p259
        %p575 = pneg %p256
        %p576 = pneg %p280
        %p577 = pneg %p277
        %p578 = pneg %p306
        %p579 = pneg %p303
        %s580 = sand.u32 %s293, 1
        %s581 = scalar_lea.sflag [#allocation4], %s580
        %s582 = sand.u32 %s293, 1
        %s583 = smul.addr %s582, 8
        %s584 = scalar_lea.vmem [#allocation17], %s583
        %p585 = pneg %p332
        %p586 = pneg %p329
        %s587 = sand.u32 %s319, 1
        %s588 = scalar_lea.sflag [#allocation19], %s587
        %s589 = sand.u32 %s319, 1
        %s590 = smul.addr %s589, 8
        %s591 = scalar_lea.vmem [#allocation18], %s590
        %v593 = vld [vmem:[%s494] sm:$0xff]
        %v594 = vpack.c.bf16 %v593, %v593
        %v595 = vld [vmem:[%s503] sm:$0xff]
        %v596 = vpack.c.bf16 %v595, %v595
        %v597 = vld [vmem:[%s512] sm:$0xff]
        %v598 = vpack.c.bf16 %v597, %v597
        %v599 = vld [vmem:[#allocation8] sm:$0xf]
        %v600 = vld [vmem:[#allocation8 + $0x4] sm:$0xf]
        %v601 = vld [vmem:[#allocation8 + $0x8] sm:$0xf]
        %v602 = vld [vmem:[#allocation8 + $0xc] sm:$0xf]
        %v603 = vld [vmem:[#allocation10] sm:$0x1]
        %v605 = vlaneseq
        %v606 = vshrl.u32 %v605, 7
        %v607 = vsub.s32 0, %v606
        %v608 = vrot.slane %v603, %v607
        %v614 = vunpack.c.l.b16 %v599
        %v615 = vunpack.c.l.b16 %v600
        %v616 = vunpack.c.l.b16 %v601
        %v617 = vunpack.c.l.b16 %v602
        %v618 = vpack.c.b16 %v615, %v614
        %v619 = vpack.c.b16 %v617, %v616
        %vm622 = vcmask 261120
        %v624 = vsel %vm622, %v594, 0
        %626 = vmatprep.subr.bf16.mxu0 0
        %627 = vmatpush1.bf16.msra.mxu0 0
        %628 = vmatprep.subr.bf16.mxu0 0
        %629 = vmatpush1.bf16.msra.mxu0 0
        %630 = vmatprep.subr.bf16.mxu0 0
        %631 = vmatpush1.bf16.msra.mxu0 0
        %632 = vmatprep.subr.bf16.mxu0 0
        %633 = vmatpush1.bf16.msra.mxu0 0
        %634 = vmatprep.subr.bf16.mxu0 0
        %635 = vmatpush1.bf16.msra.mxu0 0
        %636 = vmatprep.subr.bf16.mxu0 0
        %637 = vmatpush1.bf16.msra.mxu0 0
        %638 = vmatprep.subr.bf16.mxu0 0
        %639 = vmatpush1.bf16.msra.mxu0 %v619
        %640 = vmatprep.subr.bf16.mxu0 0
        %641 = vmatpush1.bf16.msra.mxu0 %v618
        %642 = vmatprep.subr.bf16.mxu0 0
        %643 = vmatpush2.bf16.msra.mxu0 0
        %644 = vmatprep.subr.bf16.mxu0 0
        %645 = vmatpush2.bf16.msra.mxu0 0
        %646 = vmatprep.subr.bf16.mxu0 0
        %647 = vmatpush2.bf16.msra.mxu0 0
        %648 = vmatprep.subr.bf16.mxu0 0
        %649 = vmatpush2.bf16.msra.mxu0 0
        %650 = vmatprep.subr.bf16.mxu0 0
        %651 = vmatpush2.bf16.msra.mxu0 0
        %652 = vmatprep.subr.bf16.mxu0 0
        %653 = vmatpush2.bf16.msra.mxu0 0
        %654 = vmatprep.subr.bf16.mxu0 0
        %655 = vmatpush2.bf16.msra.mxu0 0
        %656 = vmatprep.subr.bf16.mxu0 0
        %657 = vmatpush2.bf16.msra.mxu0 0
        %658 = vmatprep.mubr.bf16.mxu0 0
        %659 = vmatmul.mubr.bf16.gmra.mxu0 %v624
        %v660 = vpop.f32.mrf.mxu0
        %v661 = vadd.f32 %v608, %v660
        %v662 = vpop.f32.mrf.mxu0
        %v663 = vpop.f32.mrf.mxu0
        %v664 = vpop.f32.mrf.mxu0
        %665 = vdwg.mxu0
        %v666 = vld [vmem:[#allocation11] sm:$0xf]
        %v667 = vld [vmem:[#allocation11 + $0x4] sm:$0xf]
        %v668 = vld [vmem:[#allocation11 + $0x8] sm:$0xf]
        %v669 = vld [vmem:[#allocation11 + $0xc] sm:$0xf]
        %v670 = vld [vmem:[#allocation13] sm:$0x1]
        %v672 = vlaneseq
        %v673 = vshrl.u32 %v672, 7
        %v674 = vsub.s32 0, %v673
        %v675 = vrot.slane %v670, %v674
        %v681 = vunpack.c.l.b16 %v666
        %v682 = vunpack.c.l.b16 %v667
        %v683 = vunpack.c.l.b16 %v668
        %v684 = vunpack.c.l.b16 %v669
        %v685 = vpack.c.b16 %v682, %v681
        %v686 = vpack.c.b16 %v684, %v683
        %v690 = vsel %vm622, %v596, 0
        %692 = vmatprep.subr.bf16.mxu0 0
        %693 = vmatpush1.bf16.msra.mxu0 0
        %694 = vmatprep.subr.bf16.mxu0 0
        %695 = vmatpush1.bf16.msra.mxu0 0
        %696 = vmatprep.subr.bf16.mxu0 0
        %697 = vmatpush1.bf16.msra.mxu0 0
        %698 = vmatprep.subr.bf16.mxu0 0
        %699 = vmatpush1.bf16.msra.mxu0 0
        %700 = vmatprep.subr.bf16.mxu0 0
        %701 = vmatpush1.bf16.msra.mxu0 0
        %702 = vmatprep.subr.bf16.mxu0 0
        %703 = vmatpush1.bf16.msra.mxu0 0
        %704 = vmatprep.subr.bf16.mxu0 0
        %705 = vmatpush1.bf16.msra.mxu0 %v686
        %706 = vmatprep.subr.bf16.mxu0 0
        %707 = vmatpush1.bf16.msra.mxu0 %v685
        %708 = vmatprep.subr.bf16.mxu0 0
        %709 = vmatpush2.bf16.msra.mxu0 0
        %710 = vmatprep.subr.bf16.mxu0 0
        %711 = vmatpush2.bf16.msra.mxu0 0
        %712 = vmatprep.subr.bf16.mxu0 0
        %713 = vmatpush2.bf16.msra.mxu0 0
        %714 = vmatprep.subr.bf16.mxu0 0
        %715 = vmatpush2.bf16.msra.mxu0 0
        %716 = vmatprep.subr.bf16.mxu0 0
        %717 = vmatpush2.bf16.msra.mxu0 0
        %718 = vmatprep.subr.bf16.mxu0 0
        %719 = vmatpush2.bf16.msra.mxu0 0
        %720 = vmatprep.subr.bf16.mxu0 0
        %721 = vmatpush2.bf16.msra.mxu0 0
        %722 = vmatprep.subr.bf16.mxu0 0
        %723 = vmatpush2.bf16.msra.mxu0 0
        %724 = vmatprep.mubr.bf16.mxu0 0
        %725 = vmatmul.mubr.bf16.gmra.mxu0 %v690
        %v726 = vpop.f32.mrf.mxu0
        %v727 = vadd.f32 %v675, %v726
        %v728 = vpop.f32.mrf.mxu0
        %v729 = vpop.f32.mrf.mxu0
        %v730 = vpop.f32.mrf.mxu0
        %731 = vdwg.mxu0
        %v732 = vld [vmem:[#allocation14] sm:$0xf]
        %v733 = vld [vmem:[#allocation14 + $0x4] sm:$0xf]
        %v734 = vld [vmem:[#allocation14 + $0x8] sm:$0xf]
        %v735 = vld [vmem:[#allocation14 + $0xc] sm:$0xf]
        %v736 = vld [vmem:[#allocation16] sm:$0x1]
        %v738 = vlaneseq
        %v739 = vshrl.u32 %v738, 7
        %v740 = vsub.s32 0, %v739
        %v741 = vrot.slane %v736, %v740
        %v747 = vunpack.c.l.b16 %v732
        %v748 = vunpack.c.l.b16 %v733
        %v749 = vunpack.c.l.b16 %v734
        %v750 = vunpack.c.l.b16 %v735
        %v751 = vpack.c.b16 %v748, %v747
        %v752 = vpack.c.b16 %v750, %v749
        %v756 = vsel %vm622, %v598, 0
        %758 = vmatprep.subr.bf16.mxu0 0
        %759 = vmatpush1.bf16.msra.mxu0 0
        %760 = vmatprep.subr.bf16.mxu0 0
        %761 = vmatpush1.bf16.msra.mxu0 0
        %762 = vmatprep.subr.bf16.mxu0 0
        %763 = vmatpush1.bf16.msra.mxu0 0
        %764 = vmatprep.subr.bf16.mxu0 0
        %765 = vmatpush1.bf16.msra.mxu0 0
        %766 = vmatprep.subr.bf16.mxu0 0
        %767 = vmatpush1.bf16.msra.mxu0 0
        %768 = vmatprep.subr.bf16.mxu0 0
        %769 = vmatpush1.bf16.msra.mxu0 0
        %770 = vmatprep.subr.bf16.mxu0 0
        %771 = vmatpush1.bf16.msra.mxu0 %v752
        %772 = vmatprep.subr.bf16.mxu0 0
        %773 = vmatpush1.bf16.msra.mxu0 %v751
        %774 = vmatprep.subr.bf16.mxu0 0
        %775 = vmatpush2.bf16.msra.mxu0 0
        %776 = vmatprep.subr.bf16.mxu0 0
        %777 = vmatpush2.bf16.msra.mxu0 0
        %778 = vmatprep.subr.bf16.mxu0 0
        %779 = vmatpush2.bf16.msra.mxu0 0
        %780 = vmatprep.subr.bf16.mxu0 0
        %781 = vmatpush2.bf16.msra.mxu0 0
        %782 = vmatprep.subr.bf16.mxu0 0
        %783 = vmatpush2.bf16.msra.mxu0 0
        %784 = vmatprep.subr.bf16.mxu0 0
        %785 = vmatpush2.bf16.msra.mxu0 0
        %786 = vmatprep.subr.bf16.mxu0 0
        %787 = vmatpush2.bf16.msra.mxu0 0
        %788 = vmatprep.subr.bf16.mxu0 0
        %789 = vmatpush2.bf16.msra.mxu0 0
        %790 = vmatprep.mubr.bf16.mxu0 0
        %791 = vmatmul.mubr.bf16.gmra.mxu0 %v756
        %v792 = vpop.f32.mrf.mxu0
        %v793 = vadd.f32 %v741, %v792
        %v794 = vpop.f32.mrf.mxu0
        %v795 = vpop.f32.mrf.mxu0
        %v796 = vpop.f32.mrf.mxu0
        %797 = vdwg.mxu0
        %v798 = vpack.c.bf16 %v661, %v661
        %v799 = vpack.c.bf16 %v727, %v727
        %v800 = vpack.c.bf16 %v793, %v793
        %v802 = vsel %vm622, %v798, 0
        %v805 = vsel %vm622, %v799, 0
        %807 = vmatprep.subr.bf16.mxu0 0
        %808 = vmatpush1.bf16.xpose.msra.mxu0 0
        %809 = vmatprep.subr.bf16.mxu0 0
        %810 = vmatpush1.bf16.xpose.msra.mxu0 0
        %811 = vmatprep.subr.bf16.mxu0 0
        %812 = vmatpush1.bf16.xpose.msra.mxu0 0
        %813 = vmatprep.subr.bf16.mxu0 0
        %814 = vmatpush1.bf16.xpose.msra.mxu0 0
        %815 = vmatprep.subr.bf16.mxu0 0
        %816 = vmatpush1.bf16.xpose.msra.mxu0 0
        %817 = vmatprep.subr.bf16.mxu0 0
        %818 = vmatpush1.bf16.xpose.msra.mxu0 0
        %819 = vmatprep.subr.bf16.mxu0 0
        %820 = vmatpush1.bf16.xpose.msra.mxu0 0
        %821 = vmatprep.subr.bf16.mxu0 0
        %822 = vmatpush1.bf16.xpose.msra.mxu0 %v805
        %823 = vmatprep.subr.bf16.mxu0 0
        %824 = vmatpush2.bf16.xpose.msra.mxu0 0
        %825 = vmatprep.subr.bf16.mxu0 0
        %826 = vmatpush2.bf16.xpose.msra.mxu0 0
        %827 = vmatprep.subr.bf16.mxu0 0
        %828 = vmatpush2.bf16.xpose.msra.mxu0 0
        %829 = vmatprep.subr.bf16.mxu0 0
        %830 = vmatpush2.bf16.xpose.msra.mxu0 0
        %831 = vmatprep.subr.bf16.mxu0 0
        %832 = vmatpush2.bf16.xpose.msra.mxu0 0
        %833 = vmatprep.subr.bf16.mxu0 0
        %834 = vmatpush2.bf16.xpose.msra.mxu0 0
        %835 = vmatprep.subr.bf16.mxu0 0
        %836 = vmatpush2.bf16.xpose.msra.mxu0 0
        %837 = vmatprep.subr.bf16.mxu0 0
        %838 = vmatpush2.bf16.xpose.msra.mxu0 0
        %839 = vmatprep.mubr.bf16.mxu0 0
        %840 = vmatmul.mubr.bf16.gmra.mxu0 %v802
        %v841 = vpop.f32.mrf.mxu0
        %v842 = vadd.f32 0.0, %v841
        %v843 = vpop.f32.mrf.mxu0
        %v844 = vpop.f32.mrf.mxu0
        %v845 = vpop.f32.mrf.mxu0
        %846 = vdwg.mxu0
        %v847 = vlaneseq
        %v848 = vshrl.u32 %v847, 7
        %v849 = vlaneseq
        %v850 = vand.u32 %v849, 127
        %v851 = vsub.s32 %v848, 2
        %vm852 = vcmp.ge.s32.totalorder %v850, %v851
        %v853 = vadd.s32 %v848, 2
        %vm854 = vcmp.le.s32.totalorder %v850, %v853
        %vm855 = vmand %vm852, %vm854
        %v856 = vsel %vm855, %v842, -1e+30
        %vm857 = vcmask 64512
        %v858 = vsel %vm857, %v856, -inf
        %859 = vmax.xlane.f32.xlu0 %v858
        %v860 = vpop.xlane.xlu0 %859
        %v861 = vsub.f32 %v856, %v860
        %v862 = vmul.f32 %v861, 1.442695
        %v863 = vpow.pop %v862
        %v864 = vsel %vm857, %v863, 0.0
        %865 = vadd.xlane.f32.xlu0 %v864
        %v866 = vpop.xlane.xlu0 %865
        %v867 = vrcp.pop %v866
        %v868 = vmul.f32 %v863, %v867
        %v869 = vpack.c.bf16 %v868, %v868
        %v871 = vsel %vm857, %v869, 0
        %vm873 = vcmask 1043456
        %v875 = vsel %vm873, %v800, 0
        %877 = vmatprep.subr.bf16.mxu0 0
        %878 = vmatpush1.bf16.msra.mxu0 0
        %879 = vmatprep.subr.bf16.mxu0 0
        %880 = vmatpush1.bf16.msra.mxu0 0
        %881 = vmatprep.subr.bf16.mxu0 0
        %882 = vmatpush1.bf16.msra.mxu0 0
        %883 = vmatprep.subr.bf16.mxu0 0
        %884 = vmatpush1.bf16.msra.mxu0 0
        %885 = vmatprep.subr.bf16.mxu0 0
        %886 = vmatpush1.bf16.msra.mxu0 0
        %887 = vmatprep.subr.bf16.mxu0 0
        %888 = vmatpush1.bf16.msra.mxu0 0
        %889 = vmatprep.subr.bf16.mxu0 0
        %890 = vmatpush1.bf16.msra.mxu0 0
        %891 = vmatprep.subr.bf16.mxu0 0
        %892 = vmatpush1.bf16.msra.mxu0 %v875
        %893 = vmatprep.subr.bf16.mxu0 0
        %894 = vmatpush2.bf16.msra.mxu0 0
        %895 = vmatprep.subr.bf16.mxu0 0
        %896 = vmatpush2.bf16.msra.mxu0 0
        %897 = vmatprep.subr.bf16.mxu0 0
        %898 = vmatpush2.bf16.msra.mxu0 0
        %899 = vmatprep.subr.bf16.mxu0 0
        %900 = vmatpush2.bf16.msra.mxu0 0
        %901 = vmatprep.subr.bf16.mxu0 0
        %902 = vmatpush2.bf16.msra.mxu0 0
        %903 = vmatprep.subr.bf16.mxu0 0
        %904 = vmatpush2.bf16.msra.mxu0 0
        %905 = vmatprep.subr.bf16.mxu0 0
        %906 = vmatpush2.bf16.msra.mxu0 0
        %907 = vmatprep.subr.bf16.mxu0 0
        %908 = vmatpush2.bf16.msra.mxu0 0
        %909 = vmatprep.mubr.bf16.mxu0 0
        %910 = vmatmul.mubr.bf16.gmra.mxu0 %v871
        %v911 = vpop.f32.mrf.mxu0
        %v912 = vadd.f32 0.0, %v911
        %v913 = vpop.f32.mrf.mxu0
        %v914 = vpop.f32.mrf.mxu0
        %v915 = vpop.f32.mrf.mxu0
        %916 = vdwg.mxu0
        %v917 = vpack.c.bf16 %v912, %v912
        %v918 = vld [vmem:[%s9] sm:$0xf]
        %v919 = vld [vmem:[%s9 + $0x4] sm:$0xf]
        %v920 = vld [vmem:[%s9 + $0x8] sm:$0xf]
        %v921 = vld [vmem:[%s9 + $0xc] sm:$0xf]
        %v922 = vld [vmem:[%s10] sm:$0x1]
        %v924 = vlaneseq
        %v925 = vshrl.u32 %v924, 7
        %v926 = vsub.s32 0, %v925
        %v927 = vrot.slane %v922, %v926
        %v933 = vunpack.c.l.b16 %v918
        %v934 = vunpack.c.l.b16 %v919
        %v935 = vunpack.c.l.b16 %v920
        %v936 = vunpack.c.l.b16 %v921
        %v937 = vpack.c.b16 %v934, %v933
        %v938 = vpack.c.b16 %v936, %v935
        %v942 = vsel %vm622, %v917, 0
        %944 = vmatprep.subr.bf16.mxu0 0
        %945 = vmatpush1.bf16.msra.mxu0 0
        %946 = vmatprep.subr.bf16.mxu0 0
        %947 = vmatpush1.bf16.msra.mxu0 0
        %948 = vmatprep.subr.bf16.mxu0 0
        %949 = vmatpush1.bf16.msra.mxu0 0
        %950 = vmatprep.subr.bf16.mxu0 0
        %951 = vmatpush1.bf16.msra.mxu0 0
        %952 = vmatprep.subr.bf16.mxu0 0
        %953 = vmatpush1.bf16.msra.mxu0 0
        %954 = vmatprep.subr.bf16.mxu0 0
        %955 = vmatpush1.bf16.msra.mxu0 0
        %956 = vmatprep.subr.bf16.mxu0 0
        %957 = vmatpush1.bf16.msra.mxu0 %v938
        %958 = vmatprep.subr.bf16.mxu0 0
        %959 = vmatpush1.bf16.msra.mxu0 %v937
        %960 = vmatprep.subr.bf16.mxu0 0
        %961 = vmatpush2.bf16.msra.mxu0 0
        %962 = vmatprep.subr.bf16.mxu0 0
        %963 = vmatpush2.bf16.msra.mxu0 0
        %964 = vmatprep.subr.bf16.mxu0 0
        %965 = vmatpush2.bf16.msra.mxu0 0
        %966 = vmatprep.subr.bf16.mxu0 0
        %967 = vmatpush2.bf16.msra.mxu0 0
        %968 = vmatprep.subr.bf16.mxu0 0
        %969 = vmatpush2.bf16.msra.mxu0 0
        %970 = vmatprep.subr.bf16.mxu0 0
        %971 = vmatpush2.bf16.msra.mxu0 0
        %972 = vmatprep.subr.bf16.mxu0 0
        %973 = vmatpush2.bf16.msra.mxu0 0
        %974 = vmatprep.subr.bf16.mxu0 0
        %975 = vmatpush2.bf16.msra.mxu0 0
        %976 = vmatprep.mubr.bf16.mxu0 0
        %977 = vmatmul.mubr.bf16.gmra.mxu0 %v942
        %v978 = vpop.f32.mrf.mxu0
        %v979 = vadd.f32 %v927, %v978
        %v980 = vpop.f32.mrf.mxu0
        %v981 = vpop.f32.mrf.mxu0
        %v982 = vpop.f32.mrf.mxu0
        %983 = vdwg.mxu0
        %984 = vst.msk [vmem:[%s584] sm:$0xff] %vm622, %v979
        %985 = vst.msk [vmem:[%s591] sm:$0xff] %vm857, %v868
        %s986 = sand.u32 %s293, 1
        %s987 = scalar_lea.sflag [#allocation4], %s986
        %s988 = sand.u32 %s293, 1
        %s989 = smul.addr %s988, 8
        %s990 = scalar_lea.vmem [#allocation17], %s989
        %s991 = sand.u32 %s319, 1
        %s992 = scalar_lea.sflag [#allocation19], %s991
        %s993 = sand.u32 %s319, 1
        %s994 = smul.addr %s993, 8
        %s995 = scalar_lea.vmem [#allocation18], %s994
        // Predicated region
        $region101: #{tpu_custom_call.1} parent=63 // pred_check
          %p996 = pneg %p303
        $region102: #{tpu_custom_call.1} parent=63 // pred_check_branch
          %998 = sbr.rel (%p996) target = $region104
        $region103: #{tpu_custom_call.1} parent=63 // pred_region
          %s1000 = ssub.s32 128, 128
          %1001 = vsyncadd %s987, %s1000
          %s1002 = smul.addr %s39, 128
          %s1003 = scalar_lea.hbm %s11, %s1002
          %s1005 = sshll.u32 %s990, 4
          %s1006 = int_to_ptr.vmem [resolvable:$true] %s1005
          %1008 = dma.vmem_to_hbm [thread:$0]  %s1006, 128, %s1003, %s987
        $region104: #{tpu_custom_call.1} parent=63 // pred_fallthru
          _
        // Predicated region
        $region105: #{tpu_custom_call.1} parent=63 // pred_check
          %p1009 = pneg %p329
        $region106: #{tpu_custom_call.1} parent=63 // pred_check_branch
          %1011 = sbr.rel (%p1009) target = $region108
        $region107: #{tpu_custom_call.1} parent=63 // pred_region
          %s1013 = ssub.s32 128, 128
          %1014 = vsyncadd %s992, %s1013
          %s1015 = smul.addr %s39, 128
          %s1016 = scalar_lea.hbm %s12, %s1015
          %s1018 = sshll.u32 %s995, 4
          %s1019 = int_to_ptr.vmem [resolvable:$true] %s1018
          %1021 = dma.vmem_to_hbm [thread:$0]  %s1019, 128, %s1016, %s992
        $region108: #{tpu_custom_call.1} parent=63 // pred_fallthru
          _
      $region64: #{tpu_custom_call.1} parent=5 // pred_fallthru
        _
      %p1022 = scmp.le.s32.totalorder 2, %s34
      // Predicated region
      $region109: #{tpu_custom_call.1} parent=5 // pred_check
        %p1023 = pneg %p1022
      $region110: #{tpu_custom_call.1} parent=5 // pred_check_branch
        %1025 = sbr.rel (%p1023) target = $region112
      $region111: #{tpu_custom_call.1} parent=5 // pred_region
        %s1026 = ssub.s32 %s34, 2
        // Predicated region
        $region113: #{tpu_custom_call.1} parent=111 // pred_check
          %p1027 = pneg %p309
        $region114: #{tpu_custom_call.1} parent=111 // pred_check_branch
          %1029 = sbr.rel (%p1027) target = $region116
        $region115: #{tpu_custom_call.1} parent=111 // pred_region
          %s1030 = sand.u32 %s294, 1
          %s1031 = scalar_lea.sflag [#allocation4], %s1030
          %s1032 = sand.u32 %s294, 1
          %s1033 = smul.addr %s1032, 8
          %s1034 = scalar_lea.vmem [#allocation17], %s1033
          %1035 = dma.done %s1031, 128
        $region116: #{tpu_custom_call.1} parent=111 // pred_fallthru
          _
        // Predicated region
        $region117: #{tpu_custom_call.1} parent=111 // pred_check
          %p1036 = pneg %p335
        $region118: #{tpu_custom_call.1} parent=111 // pred_check_branch
          %1038 = sbr.rel (%p1036) target = $region120
        $region119: #{tpu_custom_call.1} parent=111 // pred_region
          %s1039 = sand.u32 %s320, 1
          %s1040 = scalar_lea.sflag [#allocation19], %s1039
          %s1041 = sand.u32 %s320, 1
          %s1042 = smul.addr %s1041, 8
          %s1043 = scalar_lea.vmem [#allocation18], %s1042
          %1044 = dma.done %s1040, 128
        $region120: #{tpu_custom_call.1} parent=111 // pred_fallthru
          _
      $region112: #{tpu_custom_call.1} parent=5 // pred_fallthru
        _
    $region6: #{tpu_custom_call.1} parent=1 // loop_footer
      %s38 = sadd.s32 1, %s34
    $region7: #{tpu_custom_call.1} parent=1 // loop_footer_branch
      %33 = sbr.rel target = $region3
    $region8: #{tpu_custom_call.1} parent=1 // loop_exit
      _
    %1045 = vsyncpa [#allocation3], 1
    %s1046 = scalar_lea.sflag [#allocation3], 1
    %1047 = vsyncpa %s1046, 1
    %1048 = vsyncpa [#allocation6], 1
    %s1049 = scalar_lea.sflag [#allocation6], 1
    %1050 = vsyncpa %s1049, 1
    %1051 = vsyncpa [#allocation9], 1
    %1052 = vsyncpa [#allocation12], 1
    %1053 = vsyncpa [#allocation15], 1
    %1054 = vsyncpa [#allocation4], 1
    %s1055 = scalar_lea.sflag [#allocation4], 1
    %1056 = vsyncpa %s1055, 1
    %1057 = vsyncpa [#allocation19], 1
    %s1058 = scalar_lea.sflag [#allocation19], 1
    %1059 = vsyncpa %s1058, 1

</llo_original>
